<compile_context>
chip_gen: v5e
topology: v5e:2x2
jax: 0.10.0
libtpu: 0.0.40
codegen_flags: <defaults>
</compile_context>

<pallas_src>
import jax
import jax.numpy as jnp
from jax import lax
from jax.experimental import pallas as pl
from jax.experimental.pallas import tpu as pltpu

_TILE_MAX = 8192  # rows; keeps double-buffered VMEM well under the 32 MiB scoped default


def _round_up(x: int, m: int) -> int:
    return ((x + m - 1) // m) * m


def _clusterer_kernel(z_ref, wa_ref, bias_ref, out_ref):
    """Membership scores for one row tile, computed in lane-dense (K, TN) layout.

    z_ref    : (TN, D)   streamed batch tile (f32)
    wa_ref   : (K, 2D)   [ c/sigma | -0.5/sigma ]          (grid-invariant)
    bias_ref : (K, 1)    -0.5 * ||c||^2 / sigma            (grid-invariant)
    out_ref  : (K, TN)   membership probabilities (softmax over K)
    """
    z = z_ref[...]                                   # (TN, D)
    wa = wa_ref[...]                                 # (K, 2D)
    bias = bias_ref[...]                             # (K, 1)

    # Fused operand [z | z*z] -> single MXU matmul with a 2D-deep contraction.
    z_aug = jnp.concatenate([z, z * z], axis=1)      # (TN, 2D)

    # logits^T = W_aug @ [z | z*z]^T + bias ; contract the shared 2D axis of
    # both operands (trans-RHS form keeps the output lane-dense as (K, TN)).
    dims = (((1,), (1,)), ((), ()))
    logits = lax.dot_general(wa, z_aug, dims,
                             preferred_element_type=jnp.float32) + bias   # (K, TN)

    # Softmax over clusters (axis 0 here == torch dim=1 after the final transpose).
    m = jnp.max(logits, axis=0, keepdims=True)       # (1, TN)
    e = jnp.exp(logits - m)                          # (K, TN)
    denom = jnp.sum(e, axis=0, keepdims=True)        # (1, TN)
    inv = pl.reciprocal(denom, approx=True)          # EUP approx reciprocal
    inv = inv * (2.0 - denom * inv)                  # one Newton step -> ~f32 exact
    out_ref[...] = (e * inv).astype(out_ref.dtype)


def parametric_clusterer_forward(z, centroids, log_sigma,
                                 min_sigma=0.0, max_sigma=20.0,
                                 initialized=True, tile_n=None,
                                 output_layout="nk"):
    """JAX/Pallas equivalent of ParametricClusterer.forward.

    output_layout: "nk" (default, matches PyTorch (N, K)) or "kn" to return the
    lane-dense (K, N) result directly and skip the wrapper transpose.
    """
    n, d = z.shape
    k, d2 = centroids.shape
    assert d == d2

    if not initialized:
        # Uninitialized path: uniform membership (matches PyTorch).
        uniform = jnp.full((n, k), 1.0 / k, dtype=jnp.float32)
        return uniform.T if output_layout == "kn" else uniform

    # --- Grid-invariant precompute, hoisted out of the kernel (runs once). ---
    c32 = centroids.astype(jnp.float32)
    sigma = jnp.clip(jnp.exp(log_sigma.astype(jnp.float32)), min_sigma, max_sigma)   # (K,)
    inv_sigma = 1.0 / sigma                                                           # (K,)
    w = c32 * inv_sigma[:, None]                                                      # (K, D)
    a = jnp.broadcast_to((-0.5 * inv_sigma)[:, None], (k, d))                         # (K, D)
    wa = jnp.concatenate([w, a], axis=1)                                              # (K, 2D)
    bias = (-0.5 * jnp.sum(c32 * c32, axis=1) * inv_sigma)[:, None]                   # (K, 1)

    # --- Adaptive row tiling: lane axis of the (K, tile_n) output block, so it
    #     must be a multiple of 128.  aim for ~2 grid steps, capped at _TILE_MAX
    #     (bounds tail padding for moderate N, amortizes per-step overhead for
    #     large N, keeps both v7x TensorCores busy). ---
    if tile_n is None:
        tile_n = max(128, min(_TILE_MAX, _round_up(-(-n // 2), 128)))
    else:
        tile_n = max(128, _round_up(int(tile_n), 128))
        tile_n = min(tile_n, max(128, _round_up(n, 128)))
    n_pad = _round_up(n, tile_n)

    z_p = z.astype(jnp.float32)
    if n_pad != n:
        z_p = jnp.pad(z_p, ((0, n_pad - n), (0, 0)))   # zero rows -> finite logits (sigma > 0)

    cost = pl.CostEstimate(
        flops=2 * n_pad * k * (2 * d) + 6 * n_pad * k,      # matmul + softmax arithmetic
        transcendentals=n_pad * (k + 1),                    # exp + reciprocal
        bytes_accessed=4 * n_pad * d + 4 * n_pad * k + 4 * k * (2 * d + 1),
    )

    out_t = pl.pallas_call(
        _clusterer_kernel,
        out_shape=jax.ShapeDtypeStruct((k, n_pad), jnp.float32),
        grid_spec=pltpu.PrefetchScalarGridSpec(
            num_scalar_prefetch=0,
            grid=(n_pad // tile_n,),
            in_specs=[
                pl.BlockSpec((tile_n, d), lambda i: (i, 0)),     # streamed z tile
                pl.BlockSpec((k, 2 * d), lambda i: (0, 0)),      # W_aug (resident, tiny)
                pl.BlockSpec((k, 1), lambda i: (0, 0)),          # bias (resident, tiny)
            ],
            out_specs=pl.BlockSpec((k, tile_n), lambda i: (0, i)),   # lane-dense
        ),
        compiler_params=pltpu.CompilerParams(
            dimension_semantics=("parallel",),       # batch axis can shard across v7x TCs
            vmem_limit_bytes=32 * 1024 * 1024,       # ample even at tile_n=8192 (lane-padded)
        ),
        cost_estimate=cost,
    )(z_p, wa, bias)

    if output_layout == "kn":
        return out_t[:, :n]
    # Module contract is (N, K); one cheap transpose outside the kernel.
    return out_t[:, :n].T


def _reference_forward(z, centroids, log_sigma, min_sigma=0.0, max_sigma=20.0):
    """Pure-JAX reference mirroring the PyTorch code (for verification)."""
    sigma = jnp.clip(jnp.exp(log_sigma), min_sigma, max_sigma)          # (K,)
    diff = z[:, None, :] - centroids[None, :, :]                         # (N,K,D)
    dist_sq = 0.5 * diff ** 2 / sigma[None, :, None]
    logits = -jnp.sum(dist_sq, axis=-1)
    return jax.nn.softmax(logits, axis=1)


if __name__ == "__main__":
    # Module hyperparameters (small, consistent with the forward pass).
    n_clusters = 8
    latent_dim = 32
    batch = 256          # adaptive tile -> tile_n=128, 2 grid steps (exercises pipelining)
    min_sigma, max_sigma = 0.0, 20.0

    key = jax.random.PRNGKey(0)
    kz, kc, ks = jax.random.split(key, 3)

    # Deterministic synthetic "parameters" (as if initialize_with_kmeans ran;
    # nn.Parameter zeros would give a trivially uniform output).
    z = jax.random.normal(kz, (batch, latent_dim), dtype=jnp.float32)
    centroids = jax.random.normal(kc, (n_clusters, latent_dim), dtype=jnp.float32)
    log_sigma = 0.1 * jax.random.normal(ks, (n_clusters,), dtype=jnp.float32)

    out = parametric_clusterer_forward(z, centroids, log_sigma,
                                       min_sigma=min_sigma, max_sigma=max_sigma,
                                       initialized=True)
    out = jax.block_until_ready(out)

    ref = _reference_forward(z, centroids, log_sigma, min_sigma, max_sigma)
    assert out.shape == (batch, n_clusters)
    # 1e-4 tolerance covers the approx-reciprocal (+Newton) softmax denominator
    # and the ||z-c||^2 expansion used for the MXU path.
    assert jnp.allclose(out, ref, atol=1e-4, rtol=1e-4), "mismatch vs reference"
    assert jnp.allclose(jnp.sum(out, axis=1), 1.0, atol=1e-5), "rows must sum to 1"

    print("KERNEL_OK")
</pallas_src>

<mosaic_0001>
module attributes {stable_mosaic.version = 11 : i64} {
  func.func @_clusterer_kernel(%arg0: i32, %arg1: memref<128x32xf32, #tpu.memory_space<vmem>>, %arg2: memref<8x64xf32, #tpu.memory_space<vmem>>, %arg3: memref<8x1xf32, #tpu.memory_space<vmem>>, %arg4: memref<8x128xf32, #tpu.memory_space<vmem>>) attributes {dimension_semantics = [#tpu.dimension_semantics<parallel>], iteration_bounds = array<i64: 2>, scalar_prefetch = 0 : i64, scratch_operands = 0 : i64, tpu.core_type = #tpu.core_type<tc>, window_params = [{transform_indices = @transform_0, window_bounds = array<i64: 128, 32>}, {pipeline_mode = #tpu.pipeline_mode<synchronous>, transform_indices = @transform_1, window_bounds = array<i64: 8, 64>}, {pipeline_mode = #tpu.pipeline_mode<synchronous>, transform_indices = @transform_2, window_bounds = array<i64: 8, 1>}, {transform_indices = @transform_3, window_bounds = array<i64: 8, 128>}]} {
    %c0 = arith.constant 0 : index
    %c0_0 = arith.constant 0 : index
    %0 = vector.load %arg1[%c0, %c0_0] : memref<128x32xf32, #tpu.memory_space<vmem>>, vector<128x32xf32>
    %c0_1 = arith.constant 0 : index
    %c0_2 = arith.constant 0 : index
    %1 = vector.load %arg2[%c0_1, %c0_2] : memref<8x64xf32, #tpu.memory_space<vmem>>, vector<8x64xf32>
    %c0_3 = arith.constant 0 : index
    %c0_4 = arith.constant 0 : index
    %2 = vector.load %arg3[%c0_3, %c0_4] : memref<8x1xf32, #tpu.memory_space<vmem>>, vector<8x1xf32>
    %3 = arith.mulf %0, %0 : vector<128x32xf32>
    %4 = tpu.concatenate %0, %3 in 1 : vector<128x32xf32>, vector<128x32xf32> -> vector<128x64xf32>
    %cst = arith.constant dense<0.000000e+00> : vector<8x128xf32>
    %5 = tpu.matmul %1, %4, %cst {dimension_numbers = #tpu.dot_dimension_numbers<[1], [1], [0], [0], [0, 0, 1, 0], [], []>} : vector<8x64xf32>, vector<128x64xf32>, vector<8x128xf32> -> vector<8x128xf32>
    %6 = vector.broadcast %2 : vector<8x1xf32> to vector<8x128xf32>
    %7 = arith.addf %5, %6 : vector<8x128xf32>
    %cst_5 = arith.constant dense<0xFF800000> : vector<128xf32>
    %8 = vector.multi_reduction <maximumf>, %7, %cst_5 [0] : vector<8x128xf32> to vector<128xf32>
    %9 = vector.shape_cast %8 : vector<128xf32> to vector<1x128xf32>
    %10 = vector.broadcast %9 : vector<1x128xf32> to vector<8x128xf32>
    %11 = arith.subf %7, %10 : vector<8x128xf32>
    %12 = math.exp %11 : vector<8x128xf32>
    %cst_6 = arith.constant dense<0.000000e+00> : vector<128xf32>
    %13 = vector.multi_reduction <add>, %12, %cst_6 [0] : vector<8x128xf32> to vector<128xf32>
    %14 = vector.shape_cast %13 : vector<128xf32> to vector<1x128xf32>
    %15 = tpu.reciprocal %14 {approx = true} : vector<1x128xf32> -> vector<1x128xf32>
    %16 = arith.mulf %14, %15 : vector<1x128xf32>
    %cst_7 = arith.constant 2.000000e+00 : f32
    %17 = vector.broadcast %cst_7 : f32 to vector<1x128xf32>
    %18 = arith.subf %17, %16 : vector<1x128xf32>
    %19 = arith.mulf %15, %18 : vector<1x128xf32>
    %20 = vector.broadcast %19 : vector<1x128xf32> to vector<8x128xf32>
    %21 = arith.mulf %12, %20 : vector<8x128xf32>
    %c0_8 = arith.constant 0 : index
    %c0_9 = arith.constant 0 : index
    %22 = vector.load %arg4[%c0_8, %c0_9] : memref<8x128xf32, #tpu.memory_space<vmem>>, vector<8x128xf32>
    tpu.vector_store %arg4[%c0_8, %c0_9], %21 {strides = array<i32>} : memref<8x128xf32, #tpu.memory_space<vmem>>, vector<8x128xf32>,
    return
  }
  func.func @transform_0(%arg0: i32) -> (i32, i32) {
    %c0_i32 = arith.constant 0 : i32
    %c0_i32_0 = arith.constant 0 : i32
    return %arg0, %c0_i32 : i32, i32
  }
  func.func @transform_1(%arg0: i32) -> (i32, i32) {
    %c0_i32 = arith.constant 0 : i32
    %c0_i32_0 = arith.constant 0 : i32
    %c0_i32_1 = arith.constant 0 : i32
    return %c0_i32, %c0_i32_0 : i32, i32
  }
  func.func @transform_2(%arg0: i32) -> (i32, i32) {
    %c0_i32 = arith.constant 0 : i32
    %c0_i32_0 = arith.constant 0 : i32
    %c0_i32_1 = arith.constant 0 : i32
    return %c0_i32, %c0_i32_0 : i32, i32
  }
  func.func @transform_3(%arg0: i32) -> (i32, i32) {
    %c0_i32 = arith.constant 0 : i32
    %c0_i32_0 = arith.constant 0 : i32
    return %c0_i32, %arg0 : i32, i32
  }
}

</mosaic_0001>

<llo_original>
// kernel: tpu_custom_call.1
$region0: #{tpu_custom_call.1}
  #allocation0 [shape = 'u32[]', space=smem, size = 0x4, offset = 0x4, fixed_abs, tag = 'smem constant byte address 0x4 - core index']
  #allocation1 [shape = 'u32[72,128]{1,0:T(1,128)}', space=vmem, size = 0x9000, scoped, tag = 'internal scratch']
  %s0 = inlined_call_operand.vmem [shape: f32[256,32], index: 0, kind: input, shape index: {}]
  %s1 = inlined_call_operand.vmem [shape: f32[8,64], index: 1, kind: input, shape index: {}]
  %s2 = inlined_call_operand.vmem [shape: f32[8,1], index: 2, kind: input, shape index: {}]
  %s3 = inlined_call_operand.hbm [shape: f32[8,256], index: 3, kind: output, shape index: {}]
  %s4 = sld [smem:[#allocation0]]
  $region45: #{tpu_custom_call.1} parent=0
    _
  %s6 = ssub.s32 1, %s4
  %s7 = scalar_select 0, %s6, %s4
  $region1: #{tpu_custom_call.1} parent=0
    #allocation2 [shape = 'u8[8192]{0}', space=vmem, size = 0x2000, scoped, tag = 'output window, operand 0']
    #allocation3 [shape = 's32[2]{0}', space=sflag, size = 0x8, scoped, tag = 'scoped memory for tpu_custom_call.1']
    %8 = vsyncpa [#allocation3], 0
    %s9 = scalar_lea.sflag [#allocation3], 1
    %10 = vsyncpa %s9, 0
    loop: start=0, step=1, limit=4
    $region2: #{tpu_custom_call.1} parent=1 // loop_pre_header
      _
    $region3: #{tpu_custom_call.1} parent=1 // loop_header
      %s12 = sphi 0, %s16
      %p13 = scmp.ge.s32.totalorder %s12, 4
      %s22 = sphi 0, %s24
      %s25 = sphi 0, %s22
      %s26 = sphi 0, %s25
      %s42 = sphi 0, %s26
      %s46 = sphi 0, %s46
      %s48 = sphi 0, %s46
      %s49 = sphi 0, %s48
      %s63 = sphi 0, %s49
      %s67 = sphi 0, %s67
      %s69 = sphi 0, %s67
      %s70 = sphi 0, %s69
      %s84 = sphi 0, %s70
      %s90 = sphi 0, %s92
      %s93 = sphi 0, %s90
      %s94 = sphi 0, %s93
      %s110 = sphi 0, %s94
    $region4: #{tpu_custom_call.1} parent=1 // loop_header_branch
      %15 = sbr.rel (%p13) target = $region8
    $region5: #{tpu_custom_call.1} parent=1 // loop_body
      %s17 = ssub.s32 %s12, 1
      %s18 = ssub.s32 %s12, 2
      %s19 = sadd.s32 %s12, 1
      %s20 = ssub.s32 %s12, %s19
      %p21 = scmp.eq.s32.totalorder %s20, 0
      %s23 = sadd.s32 %s22, 1
      %s24 = scalar_select %p21, %s22, %s23
      %p27 = pneg %p21
      %p28 = scmp.eq.s32.totalorder %s12, 1
      %p29 = por %p27, %p28
      %p30 = scmp.ne.s32.totalorder %s22, %s25
      %p31 = scmp.eq.s32.totalorder %s12, 0
      %p32 = por %p30, %p31
      %p33 = scmp.ne.s32.totalorder %s22, %s25
      %p34 = scmp.eq.s32.totalorder %s17, 1
      %p35 = por %p33, %p34
      %p36 = scmp.ne.s32.totalorder %s25, %s26
      %p37 = scmp.eq.s32.totalorder %s17, 0
      %p38 = por %p36, %p37
      %p39 = scmp.ne.s32.totalorder %s25, %s26
      %p40 = scmp.eq.s32.totalorder %s18, 1
      %p41 = por %p39, %p40
      %p43 = scmp.ne.s32.totalorder %s26, %s42
      %p44 = scmp.eq.s32.totalorder %s18, 0
      %p45 = por %p43, %p44
      %s47 = sadd.s32 %s46, 1
      %p50 = scmp.eq.s32.totalorder %s12, 1
      %p51 = scmp.ne.s32.totalorder %s46, %s48
      %p52 = scmp.eq.s32.totalorder %s12, 0
      %p53 = por %p51, %p52
      %p54 = scmp.ne.s32.totalorder %s46, %s48
      %p55 = scmp.eq.s32.totalorder %s17, 1
      %p56 = por %p54, %p55
      %p57 = scmp.ne.s32.totalorder %s48, %s49
      %p58 = scmp.eq.s32.totalorder %s17, 0
      %p59 = por %p57, %p58
      %p60 = scmp.ne.s32.totalorder %s48, %s49
      %p61 = scmp.eq.s32.totalorder %s18, 1
      %p62 = por %p60, %p61
      %p64 = scmp.ne.s32.totalorder %s49, %s63
      %p65 = scmp.eq.s32.totalorder %s18, 0
      %p66 = por %p64, %p65
      %s68 = sadd.s32 %s67, 1
      %p71 = scmp.eq.s32.totalorder %s12, 1
      %p72 = scmp.ne.s32.totalorder %s67, %s69
      %p73 = scmp.eq.s32.totalorder %s12, 0
      %p74 = por %p72, %p73
      %p75 = scmp.ne.s32.totalorder %s67, %s69
      %p76 = scmp.eq.s32.totalorder %s17, 1
      %p77 = por %p75, %p76
      %p78 = scmp.ne.s32.totalorder %s69, %s70
      %p79 = scmp.eq.s32.totalorder %s17, 0
      %p80 = por %p78, %p79
      %p81 = scmp.ne.s32.totalorder %s69, %s70
      %p82 = scmp.eq.s32.totalorder %s18, 1
      %p83 = por %p81, %p82
      %p85 = scmp.ne.s32.totalorder %s70, %s84
      %p86 = scmp.eq.s32.totalorder %s18, 0
      %p87 = por %p85, %p86
      %s88 = ssub.s32 %s12, %s19
      %p89 = scmp.eq.s32.totalorder %s88, 0
      %s91 = sadd.s32 %s90, 1
      %s92 = scalar_select %p89, %s90, %s91
      %p95 = pneg %p89
      %p96 = scmp.eq.s32.totalorder %s12, 1
      %p97 = por %p95, %p96
      %p98 = scmp.ne.s32.totalorder %s90, %s93
      %p99 = scmp.eq.s32.totalorder %s12, 0
      %p100 = por %p98, %p99
      %p101 = scmp.ne.s32.totalorder %s90, %s93
      %p102 = scmp.eq.s32.totalorder %s17, 1
      %p103 = por %p101, %p102
      %p104 = scmp.ne.s32.totalorder %s93, %s94
      %p105 = scmp.eq.s32.totalorder %s17, 0
      %p106 = por %p104, %p105
      %p107 = scmp.ne.s32.totalorder %s93, %s94
      %p108 = scmp.eq.s32.totalorder %s18, 1
      %p109 = por %p107, %p108
      %p111 = scmp.ne.s32.totalorder %s94, %s110
      %p112 = scmp.eq.s32.totalorder %s18, 0
      %p113 = por %p111, %p112
      %p114 = scmp.le.s32.totalorder 1, %s12
      %p115 = scmp.lt.s32.totalorder %s12, 3
      %p116 = pnand %p114, %p115
      %p117 = pneg %p116
      // Predicated region
      $region9: #{tpu_custom_call.1} parent=5 // pred_check
        _
      $region10: #{tpu_custom_call.1} parent=5 // pred_check_branch
        %119 = sbr.rel (%p116) target = $region12
      $region11: #{tpu_custom_call.1} parent=5 // pred_region
        %s120 = ssub.s32 %s12, 1
        // Predicated region
        $region13: #{tpu_custom_call.1} parent=11 // pred_check
          %p121 = pneg %p59
        $region14: #{tpu_custom_call.1} parent=11 // pred_check_branch
          %123 = sbr.rel (%p121) target = $region16
        $region15: #{tpu_custom_call.1} parent=11 // pred_region
          _
        $region16: #{tpu_custom_call.1} parent=11 // pred_fallthru
          _
        // Predicated region
        $region17: #{tpu_custom_call.1} parent=11 // pred_check
          %p124 = pneg %p80
        $region18: #{tpu_custom_call.1} parent=11 // pred_check_branch
          %126 = sbr.rel (%p124) target = $region20
        $region19: #{tpu_custom_call.1} parent=11 // pred_region
          _
        $region20: #{tpu_custom_call.1} parent=11 // pred_fallthru
          _
      $region12: #{tpu_custom_call.1} parent=5 // pred_fallthru
        _
      %p127 = scmp.lt.s32.totalorder %s12, 2
      // Predicated region
      $region21: #{tpu_custom_call.1} parent=5 // pred_check
        %p128 = pneg %p127
      $region22: #{tpu_custom_call.1} parent=5 // pred_check_branch
        %130 = sbr.rel (%p128) target = $region24
      $region23: #{tpu_custom_call.1} parent=5 // pred_region
        // Predicated region
        $region25: #{tpu_custom_call.1} parent=23 // pred_check
          %p131 = pneg %p32
        $region26: #{tpu_custom_call.1} parent=23 // pred_check_branch
          %133 = sbr.rel (%p131) target = $region28
        $region27: #{tpu_custom_call.1} parent=23 // pred_region
          %s134 = smul.u32 16, %s12
          %p135 = scmp.lt.s32.totalorder %s134, 31
          %s136 = scalar_select %p135, %s134, 31
          %s137 = smul.addr %s136, 8
          %s138 = scalar_lea.vmem %s0, %s137
          %s139 = smul.u32 16, %s12
        $region28: #{tpu_custom_call.1} parent=23 // pred_fallthru
          _
      $region24: #{tpu_custom_call.1} parent=5 // pred_fallthru
        _
      %p140 = scmp.le.s32.totalorder 1, %s12
      %p141 = scmp.lt.s32.totalorder %s12, 3
      %p142 = pnand %p140, %p141
      %p143 = pneg %p142
      // Predicated region
      $region29: #{tpu_custom_call.1} parent=5 // pred_check
        _
      $region30: #{tpu_custom_call.1} parent=5 // pred_check_branch
        %145 = sbr.rel (%p142) target = $region32
      $region31: #{tpu_custom_call.1} parent=5 // pred_region
        %s146 = ssub.s32 %s12, 1
        %s147 = smul.u32 16, %s17
        %p148 = scmp.lt.s32.totalorder %s147, 31
        %s149 = scalar_select %p148, %s147, 31
        %s150 = smul.addr %s149, 8
        %s151 = scalar_lea.vmem %s0, %s150
        %p152 = pneg %p38
        %p153 = pneg %p35
        %p154 = pneg %p59
        %p155 = pneg %p56
        %p156 = pneg %p80
        %p157 = pneg %p77
        %p158 = pneg %p106
        %p159 = pneg %p103
        %s160 = sand.u32 %s93, 1
        %s161 = scalar_lea.sflag [#allocation3], %s160
        %s162 = sand.u32 %s93, 1
        %s163 = smul.addr %s162, 8
        %s164 = scalar_lea.vmem [#allocation2], %s163
        %s165 = smul.u32 16, %s17
        %p166 = scmp.lt.s32.totalorder %s165, 31
        %s167 = scalar_select %p166, %s165, 31
        %s168 = smul.addr %s167, 8
        %s169 = scalar_lea.vmem %s0, %s168
        %s170 = smul.u32 16, %s17
        %v171 = vld [vmem:[%s169] sm:$0xff]
        %v172 = vld [vmem:[%s169 + $0x8] sm:$0xff]
        %v173 = vld [vmem:[%s169 + $0x10] sm:$0xff]
        %v174 = vld [vmem:[%s169 + $0x18] sm:$0xff]
        %v175 = vld [vmem:[%s169 + $0x20] sm:$0xff]
        %v176 = vld [vmem:[%s169 + $0x28] sm:$0xff]
        %v177 = vld [vmem:[%s169 + $0x30] sm:$0xff]
        %v178 = vld [vmem:[%s169 + $0x38] sm:$0xff]
        %v179 = vld [vmem:[%s169 + $0x40] sm:$0xff]
        %v180 = vld [vmem:[%s169 + $0x48] sm:$0xff]
        %v181 = vld [vmem:[%s169 + $0x50] sm:$0xff]
        %v182 = vld [vmem:[%s169 + $0x58] sm:$0xff]
        %v183 = vld [vmem:[%s169 + $0x60] sm:$0xff]
        %v184 = vld [vmem:[%s169 + $0x68] sm:$0xff]
        %v185 = vld [vmem:[%s169 + $0x70] sm:$0xff]
        %v186 = vld [vmem:[%s169 + $0x78] sm:$0xff]
        %v187 = vld [vmem:[%s1] sm:$0xff]
        %v188 = vld [vmem:[%s2] sm:$0xff]
        %v189 = vmul.f32 %v171, %v171
        %v190 = vmul.f32 %v172, %v172
        %v191 = vmul.f32 %v173, %v173
        %v192 = vmul.f32 %v174, %v174
        %v193 = vmul.f32 %v175, %v175
        %v194 = vmul.f32 %v176, %v176
        %v195 = vmul.f32 %v177, %v177
        %v196 = vmul.f32 %v178, %v178
        %v197 = vmul.f32 %v179, %v179
        %v198 = vmul.f32 %v180, %v180
        %v199 = vmul.f32 %v181, %v181
        %v200 = vmul.f32 %v182, %v182
        %v201 = vmul.f32 %v183, %v183
        %v202 = vmul.f32 %v184, %v184
        %v203 = vmul.f32 %v185, %v185
        %v204 = vmul.f32 %v186, %v186
        %221 = vrot.lane.b32.xlu0 %v189, 32
        %v222 = vpop.permute.xlu0 %221
        %223 = vrot.lane.b32.xlu0 %v190, 32
        %v224 = vpop.permute.xlu0 %223
        %225 = vrot.lane.b32.xlu0 %v191, 32
        %v226 = vpop.permute.xlu0 %225
        %227 = vrot.lane.b32.xlu0 %v192, 32
        %v228 = vpop.permute.xlu0 %227
        %229 = vrot.lane.b32.xlu0 %v193, 32
        %v230 = vpop.permute.xlu0 %229
        %231 = vrot.lane.b32.xlu0 %v194, 32
        %v232 = vpop.permute.xlu0 %231
        %233 = vrot.lane.b32.xlu0 %v195, 32
        %v234 = vpop.permute.xlu0 %233
        %235 = vrot.lane.b32.xlu0 %v196, 32
        %v236 = vpop.permute.xlu0 %235
        %237 = vrot.lane.b32.xlu0 %v197, 32
        %v238 = vpop.permute.xlu0 %237
        %239 = vrot.lane.b32.xlu0 %v198, 32
        %v240 = vpop.permute.xlu0 %239
        %241 = vrot.lane.b32.xlu0 %v199, 32
        %v242 = vpop.permute.xlu0 %241
        %243 = vrot.lane.b32.xlu0 %v200, 32
        %v244 = vpop.permute.xlu0 %243
        %245 = vrot.lane.b32.xlu0 %v201, 32
        %v246 = vpop.permute.xlu0 %245
        %247 = vrot.lane.b32.xlu0 %v202, 32
        %v248 = vpop.permute.xlu0 %247
        %249 = vrot.lane.b32.xlu0 %v203, 32
        %v250 = vpop.permute.xlu0 %249
        %251 = vrot.lane.b32.xlu0 %v204, 32
        %v252 = vpop.permute.xlu0 %251
        %vm269 = vcmask 261120
        %v270 = vsel %vm269, %v171, %v222
        %v271 = vsel %vm269, %v172, %v224
        %v272 = vsel %vm269, %v173, %v226
        %v273 = vsel %vm269, %v174, %v228
        %v274 = vsel %vm269, %v175, %v230
        %v275 = vsel %vm269, %v176, %v232
        %v276 = vsel %vm269, %v177, %v234
        %v277 = vsel %vm269, %v178, %v236
        %v278 = vsel %vm269, %v179, %v238
        %v279 = vsel %vm269, %v180, %v240
        %v280 = vsel %vm269, %v181, %v242
        %v281 = vsel %vm269, %v182, %v244
        %v282 = vsel %vm269, %v183, %v246
        %v283 = vsel %vm269, %v184, %v248
        %v284 = vsel %vm269, %v185, %v250
        %v285 = vsel %vm269, %v186, %v252
        %287 = vset.pattern.permute.xlu0 0
        %288 = vperm.xlu0 %287, %v188
        %v289 = vpop.permute.xlu0 %288
        %vm291 = vcmask 523264
        %v293 = vsel %vm291, %v187, 0
        %v296 = vsel %vm291, %v270, 0
        %v299 = vsel %vm291, %v271, 0
        %v302 = vsel %vm291, %v272, 0
        %v305 = vsel %vm291, %v273, 0
        %v308 = vsel %vm291, %v274, 0
        %v311 = vsel %vm291, %v275, 0
        %v314 = vsel %vm291, %v276, 0
        %v317 = vsel %vm291, %v277, 0
        %v320 = vsel %vm291, %v278, 0
        %v323 = vsel %vm291, %v279, 0
        %v326 = vsel %vm291, %v280, 0
        %v329 = vsel %vm291, %v281, 0
        %v332 = vsel %vm291, %v282, 0
        %v335 = vsel %vm291, %v283, 0
        %v338 = vsel %vm291, %v284, 0
        %v341 = vsel %vm291, %v285, 0
        %343 = vmatpush.xpose.msra.mxu0 %v341
        %344 = vmatpush.xpose.msra.mxu0 %v338
        %345 = vmatpush.xpose.msra.mxu0 %v335
        %346 = vmatpush.xpose.msra.mxu0 %v332
        %347 = vmatpush.xpose.msra.mxu0 %v329
        %348 = vmatpush.xpose.msra.mxu0 %v326
        %349 = vmatpush.xpose.msra.mxu0 %v323
        %350 = vmatpush.xpose.msra.mxu0 %v320
        %351 = vmatpush.xpose.msra.mxu0 %v317
        %352 = vmatpush.xpose.msra.mxu0 %v314
        %353 = vmatpush.xpose.msra.mxu0 %v311
        %354 = vmatpush.xpose.msra.mxu0 %v308
        %355 = vmatpush.xpose.msra.mxu0 %v305
        %356 = vmatpush.xpose.msra.mxu0 %v302
        %357 = vmatpush.xpose.msra.mxu0 %v299
        %358 = vmatpush.xpose.msra.mxu0 %v296
        %359 = vmatmul.f32.gmra.mxu0 %v293
        %v360 = vpop.f32.mrf.mxu0
        %v361 = vadd.f32 %v289, %v360
        %362 = vdwg.mxu0
        %v363 = vrot.slane %v361, 4
        %v364 = vmax.f32 %v361, %v363
        %v365 = vrot.slane %v364, 2
        %v366 = vmax.f32 %v364, %v365
        %v367 = vrot.slane %v366, 1
        %v368 = vmax.f32 %v366, %v367
        %v369 = vsub.f32 %v361, %v368
        %v370 = vmul.f32 %v369, 1.442695
        %v371 = vpow.pop %v370
        %v372 = vrot.slane %v371, 4
        %v373 = vadd.f32 %v371, %v372
        %v374 = vrot.slane %v373, 2
        %v375 = vadd.f32 %v373, %v374
        %v376 = vrot.slane %v375, 1
        %v377 = vadd.f32 %v375, %v376
        %v378 = vrcp.pop %v377
        %v379 = vmul.f32 %v377, %v378
        %v380 = vsub.f32 2.0, %v379
        %v381 = vmul.f32 %v378, %v380
        %v382 = vmul.f32 %v371, %v381
        %383 = vst [vmem:[%s164] sm:$0xff] %v382
        %s384 = sand.u32 %s93, 1
        %s385 = scalar_lea.sflag [#allocation3], %s384
        %s386 = sand.u32 %s93, 1
        %s387 = smul.addr %s386, 8
        %s388 = scalar_lea.vmem [#allocation2], %s387
        // Predicated region
        $region33: #{tpu_custom_call.1} parent=31 // pred_check
          %p389 = pneg %p103
        $region34: #{tpu_custom_call.1} parent=31 // pred_check_branch
          %391 = sbr.rel (%p389) target = $region36
        $region35: #{tpu_custom_call.1} parent=31 // pred_region
          %393 = vsyncadd %s385, 0
          %s394 = smul.addr %s17, 8
          %s395 = scalar_lea.hbm %s3, %s394
          %s397 = sshll.u32 %s388, 4
          %s398 = int_to_ptr.vmem [resolvable:$true] %s397
          %s399 = sshll.u32 %s395, 4
          %s400 = int_to_ptr.hbm [resolvable:$true] %s399
          %402 = dma.vmem_to_hbm [thread:$0]  %s398, 128, %s400, %s385
        $region36: #{tpu_custom_call.1} parent=31 // pred_fallthru
          _
      $region32: #{tpu_custom_call.1} parent=5 // pred_fallthru
        _
      %p403 = scmp.le.s32.totalorder 2, %s12
      // Predicated region
      $region37: #{tpu_custom_call.1} parent=5 // pred_check
        %p404 = pneg %p403
      $region38: #{tpu_custom_call.1} parent=5 // pred_check_branch
        %406 = sbr.rel (%p404) target = $region40
      $region39: #{tpu_custom_call.1} parent=5 // pred_region
        %s407 = ssub.s32 %s12, 2
        // Predicated region
        $region41: #{tpu_custom_call.1} parent=39 // pred_check
          %p408 = pneg %p109
        $region42: #{tpu_custom_call.1} parent=39 // pred_check_branch
          %410 = sbr.rel (%p408) target = $region44
        $region43: #{tpu_custom_call.1} parent=39 // pred_region
          %s411 = sand.u32 %s94, 1
          %s412 = scalar_lea.sflag [#allocation3], %s411
          %s413 = sand.u32 %s94, 1
          %s414 = smul.addr %s413, 8
          %s415 = scalar_lea.vmem [#allocation2], %s414
          %417 = dma.done %s412, 128
        $region44: #{tpu_custom_call.1} parent=39 // pred_fallthru
          _
      $region40: #{tpu_custom_call.1} parent=5 // pred_fallthru
        _
    $region6: #{tpu_custom_call.1} parent=1 // loop_footer
      %s16 = sadd.s32 1, %s12
    $region7: #{tpu_custom_call.1} parent=1 // loop_footer_branch
      %11 = sbr.rel target = $region3
    $region8: #{tpu_custom_call.1} parent=1 // loop_exit
      _
    %418 = vsyncpa [#allocation3], 1
    %s419 = scalar_lea.sflag [#allocation3], 1
    %420 = vsyncpa %s419, 1

</llo_original>
